<compile_context>
chip_gen: v7x
topology: tpu7x:2x2x1
jax: 0.10.0
libtpu: 0.0.40
codegen_flags: <defaults>
</compile_context>

<pallas_src>
import jax
import jax.numpy as jnp
from jax.experimental import pallas as pl
from jax.experimental.pallas import tpu as pltpu


def _l2norm(w, axis):
    # Matches F.normalize(p=2, eps=1e-12): v / max(||v||, eps)
    norm = jnp.sqrt(jnp.sum(w * w, axis=axis, keepdims=True))
    return w / jnp.maximum(norm, 1e-12)


def _round_up(n, m):
    return ((n + m - 1) // m) * m


def _ff_kernel(x_ref, w1_ref, wo_ref, o_ref):
    # Token tile -> bf16 for the MXU; accumulation stays f32.
    x = x_ref[...].astype(jnp.bfloat16)            # (tm, dim)
    w1 = w1_ref[...]                               # (dim, 2*di) = [Wh^T*hs | Wg^T*gs*sqrt(dim)], bf16
    wo = wo_ref[...]                               # (di, dim)   = Wo^T, bf16

    di = wo_ref.shape[0]                           # dim_inner (static)

    # Single fused first-stage matmul: MXU-native (tm, dim) @ (dim, 2*di).
    hg = jnp.dot(x, w1, preferred_element_type=jnp.float32)    # (tm, 2*di) f32
    hidden = hg[:, :di]                            # static, lane-aligned slices
    gate = hg[:, di:]

    # SiLU(gate) * hidden in f32 on the VPU (scales already folded into w1).
    h = (gate * jax.nn.sigmoid(gate)) * hidden

    # Second stage: (tm, di) @ (di, dim), MXU-native.
    out = jnp.dot(h.astype(jnp.bfloat16), wo, preferred_element_type=jnp.float32)
    o_ref[...] = out.astype(o_ref.dtype)


def feedforward_pallas(x, wh, wg, hidden_scale, gate_scale, wo, *, tm=1024):
    """x: (N, dim), streamed in x.dtype (bf16 recommended). Returns (N, dim) in x.dtype."""
    N, dim = x.shape
    dim_inner = wh.shape[0]

    # L2-norm parametrization + hidden/gate scales + sqrt(dim) folded into the
    # resident weights ONCE in the wrapper (f32 math, then a single bf16 cast).
    whn = _l2norm(wh.astype(jnp.float32), axis=-1)               # (di, dim)
    wgn = _l2norm(wg.astype(jnp.float32), axis=-1)               # (di, dim)
    won = _l2norm(wo.astype(jnp.float32), axis=0)                # (dim, di)

    hs = hidden_scale.astype(jnp.float32).reshape(dim_inner, 1)
    gs = (gate_scale.astype(jnp.float32) * (dim ** 0.5)).reshape(dim_inner, 1)

    # Pre-transposed, scale-folded, fused first-stage RHS and second-stage RHS.
    w1 = jnp.concatenate([(whn * hs).T, (wgn * gs).T], axis=1).astype(jnp.bfloat16)  # (dim, 2*di)
    wo_t = won.T.astype(jnp.bfloat16)                                                # (di, dim)

    # Token tile: large to amortize per-step pipeline overhead, clamped for small N
    # (multiple of 16 for bf16 sublane packing), and split so the "parallel" axis
    # has >= 2 blocks (both v7x TensorCores get work) once N is big enough.
    tm_eff = min(tm, _round_up(N, 16))
    if pl.cdiv(N, tm_eff) < 2 and N >= 512:
        tm_eff = _round_up(pl.cdiv(N, 2), 256)
    n_blocks = pl.cdiv(N, tm_eff)        # no jnp.pad: Pallas masks the ragged tail block

    # VMEM budget from the actual footprint (+margin), kept well under v7x's 64 MiB.
    itemsize = jnp.dtype(x.dtype).itemsize
    io_tiles = 4 * tm_eff * dim * itemsize                       # double-buffered x + out tiles
    w_bytes = (dim * 2 * dim_inner + dim_inner * dim) * 2        # bf16 resident weights
    interm = tm_eff * (2 * dim_inner + dim_inner + dim) * 4      # f32 intermediates
    vmem_limit = int(io_tiles + 2 * w_bytes + 2 * interm) + (4 << 20)
    vmem_limit = max(min(vmem_limit, 48 << 20), 16 << 20)

    out = pl.pallas_call(
        _ff_kernel,
        out_shape=jax.ShapeDtypeStruct((N, dim), x.dtype),
        grid_spec=pltpu.PrefetchScalarGridSpec(
            num_scalar_prefetch=0,
            grid=(n_blocks,),
            in_specs=[
                pl.BlockSpec((tm_eff, dim), lambda i: (i, 0)),           # x tile
                pl.BlockSpec((dim, 2 * dim_inner), lambda i: (0, 0)),    # [Wh^T*hs | Wg^T*gs] resident
                pl.BlockSpec((dim_inner, dim), lambda i: (0, 0)),        # Wo^T resident
            ],
            out_specs=pl.BlockSpec((tm_eff, dim), lambda i: (i, 0)),
        ),
        compiler_params=pltpu.CompilerParams(
            dimension_semantics=("parallel",),       # token axis sharded across TCs
            vmem_limit_bytes=vmem_limit,
        ),
    )(x, w1, wo_t)
    return out


def feedforward_ref(x, wh, wg, hidden_scale, gate_scale, wo):
    dim = x.shape[-1]
    whn = _l2norm(wh, axis=-1)
    wgn = _l2norm(wg, axis=-1)
    won = _l2norm(wo, axis=0)
    hidden = x @ whn.T * hidden_scale
    gate = x @ wgn.T * gate_scale * (dim ** 0.5)
    h = jax.nn.silu(gate) * hidden
    return h @ won.T


if __name__ == "__main__":
    # Small shapes consistent with the module (lane-dense 128-wide output):
    #   dim = 128, FeedForward(dim_inner=192) -> int(192*2/3) = 128
    batch, seq, dim = 2, 8, 128
    dim_inner = int(192 * 2 / 3)  # 128

    key = jax.random.PRNGKey(0)
    kx, kh, kg, ko = jax.random.split(key, 4)

    x_f32 = jax.random.normal(kx, (batch, seq, dim), dtype=jnp.float32)
    x = x_f32.astype(jnp.bfloat16)            # activations streamed in bf16

    # Deterministic parameter init (nn.Linear-like uniform); scales init to ones.
    bound_h = 1.0 / (dim ** 0.5)
    bound_o = 1.0 / (dim_inner ** 0.5)
    wh = jax.random.uniform(kh, (dim_inner, dim), jnp.float32, -bound_h, bound_h)
    wg = jax.random.uniform(kg, (dim_inner, dim), jnp.float32, -bound_h, bound_h)
    wo = jax.random.uniform(ko, (dim, dim_inner), jnp.float32, -bound_o, bound_o)
    hidden_scale = jnp.ones((dim_inner,), jnp.float32)
    gate_scale = jnp.ones((dim_inner,), jnp.float32)

    x2d = x.reshape(batch * seq, dim)

    out = feedforward_pallas(x2d, wh, wg, hidden_scale, gate_scale, wo)
    out = jax.block_until_ready(out).astype(jnp.float32).reshape(batch, seq, dim)

    # Reference in f32 from the SAME bf16 activations (isolates kernel error).
    ref = feedforward_ref(x2d.astype(jnp.float32), wh, wg, hidden_scale,
                          gate_scale, wo).reshape(batch, seq, dim)

    assert out.shape == (batch, seq, dim)
    # bf16 MXU inputs/outputs with f32 accumulation: compare relative to output scale.
    scale = jnp.maximum(jnp.max(jnp.abs(ref)), 1.0)
    max_rel_err = jnp.max(jnp.abs(out - ref)) / scale
    assert max_rel_err < 5e-2, f"mismatch vs reference: max rel err {max_rel_err}"
    print("KERNEL_OK")
</pallas_src>

<mosaic_0001>
module attributes {stable_mosaic.version = 11 : i64} {
  func.func @_ff_kernel(%arg0: i32, %arg1: memref<16x128xbf16, #tpu.memory_space<vmem>>, %arg2: memref<128x256xbf16, #tpu.memory_space<vmem>>, %arg3: memref<128x128xbf16, #tpu.memory_space<vmem>>, %arg4: memref<16x128xbf16, #tpu.memory_space<vmem>>) attributes {dimension_semantics = [#tpu.dimension_semantics<parallel>], iteration_bounds = array<i64: 1>, scalar_prefetch = 0 : i64, scratch_operands = 0 : i64, tpu.core_type = #tpu.core_type<tc>, window_params = [{transform_indices = @transform_0, window_bounds = array<i64: 16, 128>}, {pipeline_mode = #tpu.pipeline_mode<synchronous>, transform_indices = @transform_1, window_bounds = array<i64: 128, 256>}, {pipeline_mode = #tpu.pipeline_mode<synchronous>, transform_indices = @transform_2, window_bounds = array<i64: 128, 128>}, {transform_indices = @transform_3, window_bounds = array<i64: 16, 128>}]} {
    %c0 = arith.constant 0 : index
    %c0_0 = arith.constant 0 : index
    %0 = vector.load %arg1[%c0, %c0_0] : memref<16x128xbf16, #tpu.memory_space<vmem>>, vector<16x128xbf16>
    %c0_1 = arith.constant 0 : index
    %c0_2 = arith.constant 0 : index
    %1 = vector.load %arg2[%c0_1, %c0_2] : memref<128x256xbf16, #tpu.memory_space<vmem>>, vector<128x256xbf16>
    %c0_3 = arith.constant 0 : index
    %c0_4 = arith.constant 0 : index
    %2 = vector.load %arg3[%c0_3, %c0_4] : memref<128x128xbf16, #tpu.memory_space<vmem>>, vector<128x128xbf16>
    %cst = arith.constant dense<0.000000e+00> : vector<16x256xf32>
    %3 = tpu.matmul %0, %1, %cst {dimension_numbers = #tpu.dot_dimension_numbers<[1], [0], [0], [1], [0, 0, 1, 1], [], []>} : vector<16x128xbf16>, vector<128x256xbf16>, vector<16x256xf32> -> vector<16x256xf32>
    %4 = vector.extract_strided_slice %3 {offsets = [0, 0], sizes = [16, 128], strides = [1, 1]} : vector<16x256xf32> to vector<16x128xf32>
    %5 = vector.extract_strided_slice %3 {offsets = [0, 128], sizes = [16, 128], strides = [1, 1]} : vector<16x256xf32> to vector<16x128xf32>
    %6 = arith.negf %5 : vector<16x128xf32>
    %7 = math.exp %6 : vector<16x128xf32>
    %cst_5 = arith.constant 1.000000e+00 : f32
    %8 = vector.broadcast %cst_5 : f32 to vector<16x128xf32>
    %9 = arith.addf %8, %7 : vector<16x128xf32>
    %10 = arith.divf %8, %9 : vector<16x128xf32>
    %11 = arith.mulf %5, %10 : vector<16x128xf32>
    %12 = arith.mulf %11, %4 : vector<16x128xf32>
    %13 = arith.truncf %12 : vector<16x128xf32> to vector<16x128xbf16>
    %cst_6 = arith.constant dense<0.000000e+00> : vector<16x128xf32>
    %14 = tpu.matmul %13, %2, %cst_6 {dimension_numbers = #tpu.dot_dimension_numbers<[1], [0], [0], [1], [0, 0, 1, 1], [], []>} : vector<16x128xbf16>, vector<128x128xbf16>, vector<16x128xf32> -> vector<16x128xf32>
    %15 = arith.truncf %14 : vector<16x128xf32> to vector<16x128xbf16>
    %c0_7 = arith.constant 0 : index
    %c0_8 = arith.constant 0 : index
    %16 = vector.load %arg4[%c0_7, %c0_8] : memref<16x128xbf16, #tpu.memory_space<vmem>>, vector<16x128xbf16>
    tpu.vector_store %arg4[%c0_7, %c0_8], %15 {strides = array<i32>} : memref<16x128xbf16, #tpu.memory_space<vmem>>, vector<16x128xbf16>,
    return
  }
  func.func @transform_0(%arg0: i32) -> (i32, i32) {
    %c0_i32 = arith.constant 0 : i32
    %c0_i32_0 = arith.constant 0 : i32
    return %arg0, %c0_i32 : i32, i32
  }
  func.func @transform_1(%arg0: i32) -> (i32, i32) {
    %c0_i32 = arith.constant 0 : i32
    %c0_i32_0 = arith.constant 0 : i32
    %c0_i32_1 = arith.constant 0 : i32
    return %c0_i32, %c0_i32_0 : i32, i32
  }
  func.func @transform_2(%arg0: i32) -> (i32, i32) {
    %c0_i32 = arith.constant 0 : i32
    %c0_i32_0 = arith.constant 0 : i32
    %c0_i32_1 = arith.constant 0 : i32
    return %c0_i32, %c0_i32_0 : i32, i32
  }
  func.func @transform_3(%arg0: i32) -> (i32, i32) {
    %c0_i32 = arith.constant 0 : i32
    %c0_i32_0 = arith.constant 0 : i32
    return %arg0, %c0_i32 : i32, i32
  }
}

</mosaic_0001>

<llo_original>
// kernel: tpu_custom_call.1
$region0: #{tpu_custom_call.1}
  #allocation0 [shape = 'u32[]', space=smem, size = 0x4, offset = 0x4, fixed_abs, tag = 'smem constant byte address 0x4 - core index']
  #allocation1 [shape = 'u32[144,128]{1,0:T(1,128)}', space=vmem, size = 0x12000, scoped, tag = 'internal scratch']
  %s0 = inlined_call_operand.hbm [shape: bf16[16,128], index: 0, kind: input, shape index: {}]
  %s1 = inlined_call_operand.hbm [shape: bf16[128,256], index: 1, kind: input, shape index: {}]
  %s2 = inlined_call_operand.hbm [shape: bf16[128,128], index: 2, kind: input, shape index: {}]
  %s3 = inlined_call_operand.hbm [shape: bf16[16,128], index: 3, kind: output, shape index: {}]
  %s4 = sld [smem:[#allocation0]]
  $region34: #{tpu_custom_call.1} parent=0
    _
  %s6 = ssub.s32 1, %s4
  %s7 = scalar_select 0, %s6, %s4
  $region1: #{tpu_custom_call.1} parent=0
    #allocation2 [shape = 'u8[4096]{0}', space=vmem, size = 0x1000, scoped, tag = 'input window, operand 0, single buffered']
    #allocation3 [shape = 's32[1]{0}', space=sflag, size = 0x4, scoped, tag = 'scoped memory for tpu_custom_call.1']
    #allocation4 [shape = 's32[1]{0}', space=sflag, size = 0x4, scoped, tag = 'scoped memory for tpu_custom_call.1']
    #allocation5 [shape = 'u8[65536]{0}', space=vmem, size = 0x10000, scoped, tag = 'input window, operand 1, single buffered']
    #allocation6 [shape = 's32[1]{0}', space=sflag, size = 0x4, scoped, tag = 'scoped memory for tpu_custom_call.1']
    #allocation7 [shape = 'u8[32768]{0}', space=vmem, size = 0x8000, scoped, tag = 'input window, operand 2, single buffered']
    #allocation8 [shape = 'u8[4096]{0}', space=vmem, size = 0x1000, scoped, tag = 'output window, operand 0, single buffered']
    %8 = vsyncpa [#allocation3], 0
    %9 = vsyncpa [#allocation6], 0
    %10 = vsyncpa [#allocation4], 0
    // Predicated region
    $region2: #{tpu_custom_call.1} parent=1 // pred_check
      _
    $region3: #{tpu_custom_call.1} parent=1 // pred_check_branch
      %12 = sbr.rel (0) target = $region5
    $region4: #{tpu_custom_call.1} parent=1 // pred_region
      %s14 = ssub.s32 128, 128
      %15 = vsyncadd [#allocation3], %s14
      %s16 = sshll.u32 [#allocation2], 4
      %s17 = int_to_ptr.vmem [resolvable:$true] %s16
      %22 = dma.hbm_to_vmem [thread:$0]  %s0, 128, %s17, [#allocation3], 64, 64, 4
    $region5: #{tpu_custom_call.1} parent=1 // pred_fallthru
      _
    // Predicated region
    $region6: #{tpu_custom_call.1} parent=1 // pred_check
      _
    $region7: #{tpu_custom_call.1} parent=1 // pred_check_branch
      %24 = sbr.rel (0) target = $region9
    $region8: #{tpu_custom_call.1} parent=1 // pred_region
      %s26 = ssub.s32 2048, 2048
      %27 = vsyncadd [#allocation6], %s26
      %s28 = sshll.u32 [#allocation5], 4
      %s29 = int_to_ptr.vmem [resolvable:$true] %s28
      %34 = dma.hbm_to_vmem [thread:$0]  %s1, 2048, %s29, [#allocation6], 128, 128, 8
    $region9: #{tpu_custom_call.1} parent=1 // pred_fallthru
      _
    // Predicated region
    $region10: #{tpu_custom_call.1} parent=1 // pred_check
      _
    $region11: #{tpu_custom_call.1} parent=1 // pred_check_branch
      %36 = sbr.rel (0) target = $region13
    $region12: #{tpu_custom_call.1} parent=1 // pred_region
      %s38 = ssub.s32 1024, 1024
      %39 = vsyncadd [#allocation6], %s38
      %s40 = sshll.u32 [#allocation7], 4
      %s41 = int_to_ptr.vmem [resolvable:$true] %s40
      %46 = dma.hbm_to_vmem [thread:$0]  %s2, 1024, %s41, [#allocation6], 64, 64, 4
    $region13: #{tpu_custom_call.1} parent=1 // pred_fallthru
      _
    // Predicated region
    $region14: #{tpu_custom_call.1} parent=1 // pred_check
      _
    $region15: #{tpu_custom_call.1} parent=1 // pred_check_branch
      %48 = sbr.rel (0) target = $region17
    $region16: #{tpu_custom_call.1} parent=1 // pred_region
      %49 = dma.done [#allocation3], 128
    $region17: #{tpu_custom_call.1} parent=1 // pred_fallthru
      _
    // Predicated region
    $region18: #{tpu_custom_call.1} parent=1 // pred_check
      _
    $region19: #{tpu_custom_call.1} parent=1 // pred_check_branch
      %51 = sbr.rel (0) target = $region21
    $region20: #{tpu_custom_call.1} parent=1 // pred_region
      %52 = dma.done [#allocation6], 2048
    $region21: #{tpu_custom_call.1} parent=1 // pred_fallthru
      _
    // Predicated region
    $region22: #{tpu_custom_call.1} parent=1 // pred_check
      _
    $region23: #{tpu_custom_call.1} parent=1 // pred_check_branch
      %54 = sbr.rel (0) target = $region25
    $region24: #{tpu_custom_call.1} parent=1 // pred_region
      %55 = dma.done [#allocation6], 1024
    $region25: #{tpu_custom_call.1} parent=1 // pred_fallthru
      _
    %v57 = vld [vmem:[#allocation2] sm:$0xf]
    %v58 = vld [vmem:[#allocation2 + $0x4] sm:$0xf]
    %v59 = vld [vmem:[#allocation5] sm:$0xff]
    %v60 = vld [vmem:[#allocation5 + $0x8] sm:$0xff]
    %v61 = vld [vmem:[#allocation5 + $0x10] sm:$0xff]
    %v62 = vld [vmem:[#allocation5 + $0x18] sm:$0xff]
    %v63 = vld [vmem:[#allocation5 + $0x20] sm:$0xff]
    %v64 = vld [vmem:[#allocation5 + $0x28] sm:$0xff]
    %v65 = vld [vmem:[#allocation5 + $0x30] sm:$0xff]
    %v66 = vld [vmem:[#allocation5 + $0x38] sm:$0xff]
    %v67 = vld [vmem:[#allocation5 + $0x40] sm:$0xff]
    %v68 = vld [vmem:[#allocation5 + $0x48] sm:$0xff]
    %v69 = vld [vmem:[#allocation5 + $0x50] sm:$0xff]
    %v70 = vld [vmem:[#allocation5 + $0x58] sm:$0xff]
    %v71 = vld [vmem:[#allocation5 + $0x60] sm:$0xff]
    %v72 = vld [vmem:[#allocation5 + $0x68] sm:$0xff]
    %v73 = vld [vmem:[#allocation5 + $0x70] sm:$0xff]
    %v74 = vld [vmem:[#allocation5 + $0x78] sm:$0xff]
    %v75 = vld [vmem:[#allocation7] sm:$0xf]
    %v76 = vld [vmem:[#allocation7 + $0x4] sm:$0xf]
    %v77 = vld [vmem:[#allocation7 + $0x8] sm:$0xf]
    %v78 = vld [vmem:[#allocation7 + $0xc] sm:$0xf]
    %v79 = vld [vmem:[#allocation7 + $0x10] sm:$0xf]
    %v80 = vld [vmem:[#allocation7 + $0x14] sm:$0xf]
    %v81 = vld [vmem:[#allocation7 + $0x18] sm:$0xf]
    %v82 = vld [vmem:[#allocation7 + $0x1c] sm:$0xf]
    %v83 = vld [vmem:[#allocation7 + $0x20] sm:$0xf]
    %v84 = vld [vmem:[#allocation7 + $0x24] sm:$0xf]
    %v85 = vld [vmem:[#allocation7 + $0x28] sm:$0xf]
    %v86 = vld [vmem:[#allocation7 + $0x2c] sm:$0xf]
    %v87 = vld [vmem:[#allocation7 + $0x30] sm:$0xf]
    %v88 = vld [vmem:[#allocation7 + $0x34] sm:$0xf]
    %v89 = vld [vmem:[#allocation7 + $0x38] sm:$0xf]
    %v90 = vld [vmem:[#allocation7 + $0x3c] sm:$0xf]
    %v93 = vunpack.c.l.b16 %v57
    %v94 = vunpack.c.l.b16 %v58
    %v95 = vpack.c.b16 %v94, %v93
    %v113 = vunpack.c.l.b16 %v59
    %v114 = vunpack.c.h.b16 %v59
    %v115 = vunpack.c.l.b16 %v60
    %v116 = vunpack.c.h.b16 %v60
    %v117 = vunpack.c.l.b16 %v61
    %v118 = vunpack.c.h.b16 %v61
    %v119 = vunpack.c.l.b16 %v62
    %v120 = vunpack.c.h.b16 %v62
    %v121 = vunpack.c.l.b16 %v63
    %v122 = vunpack.c.h.b16 %v63
    %v123 = vunpack.c.l.b16 %v64
    %v124 = vunpack.c.h.b16 %v64
    %v125 = vunpack.c.l.b16 %v65
    %v126 = vunpack.c.h.b16 %v65
    %v127 = vunpack.c.l.b16 %v66
    %v128 = vunpack.c.h.b16 %v66
    %v129 = vunpack.c.l.b16 %v67
    %v130 = vunpack.c.h.b16 %v67
    %v131 = vunpack.c.l.b16 %v68
    %v132 = vunpack.c.h.b16 %v68
    %v133 = vunpack.c.l.b16 %v69
    %v134 = vunpack.c.h.b16 %v69
    %v135 = vunpack.c.l.b16 %v70
    %v136 = vunpack.c.h.b16 %v70
    %v137 = vunpack.c.l.b16 %v71
    %v138 = vunpack.c.h.b16 %v71
    %v139 = vunpack.c.l.b16 %v72
    %v140 = vunpack.c.h.b16 %v72
    %v141 = vunpack.c.l.b16 %v73
    %v142 = vunpack.c.h.b16 %v73
    %v143 = vunpack.c.l.b16 %v74
    %v144 = vunpack.c.h.b16 %v74
    %v145 = vpack.c.b16 %v115, %v113
    %v146 = vpack.c.b16 %v116, %v114
    %v147 = vpack.c.b16 %v119, %v117
    %v148 = vpack.c.b16 %v120, %v118
    %v149 = vpack.c.b16 %v123, %v121
    %v150 = vpack.c.b16 %v124, %v122
    %v151 = vpack.c.b16 %v127, %v125
    %v152 = vpack.c.b16 %v128, %v126
    %v153 = vpack.c.b16 %v131, %v129
    %v154 = vpack.c.b16 %v132, %v130
    %v155 = vpack.c.b16 %v135, %v133
    %v156 = vpack.c.b16 %v136, %v134
    %v157 = vpack.c.b16 %v139, %v137
    %v158 = vpack.c.b16 %v140, %v138
    %v159 = vpack.c.b16 %v143, %v141
    %v160 = vpack.c.b16 %v144, %v142
    %177 = vmatprep.subr.bf16.mxu0 %v146
    %178 = vmatpush1.bf16.msra.mxu0 %v145
    %179 = vmatprep.subr.bf16.mxu0 %v148
    %180 = vmatpush1.bf16.msra.mxu0 %v147
    %181 = vmatprep.subr.bf16.mxu0 %v150
    %182 = vmatpush1.bf16.msra.mxu0 %v149
    %183 = vmatprep.subr.bf16.mxu0 %v152
    %184 = vmatpush1.bf16.msra.mxu0 %v151
    %185 = vmatprep.subr.bf16.mxu0 %v154
    %186 = vmatpush1.bf16.msra.mxu0 %v153
    %187 = vmatprep.subr.bf16.mxu0 %v156
    %188 = vmatpush1.bf16.msra.mxu0 %v155
    %189 = vmatprep.subr.bf16.mxu0 %v158
    %190 = vmatpush1.bf16.msra.mxu0 %v157
    %191 = vmatprep.subr.bf16.mxu0 %v160
    %192 = vmatpush1.bf16.msra.mxu0 %v159
    %193 = vmatprep.subr.bf16.mxu0 0
    %194 = vmatpush1.bf16.msra.mxu0 0
    %195 = vmatprep.subr.bf16.mxu0 0
    %196 = vmatpush1.bf16.msra.mxu0 0
    %197 = vmatprep.subr.bf16.mxu0 0
    %198 = vmatpush1.bf16.msra.mxu0 0
    %199 = vmatprep.subr.bf16.mxu0 0
    %200 = vmatpush1.bf16.msra.mxu0 0
    %201 = vmatprep.subr.bf16.mxu0 0
    %202 = vmatpush1.bf16.msra.mxu0 0
    %203 = vmatprep.subr.bf16.mxu0 0
    %204 = vmatpush1.bf16.msra.mxu0 0
    %205 = vmatprep.subr.bf16.mxu0 0
    %206 = vmatpush1.bf16.msra.mxu0 0
    %207 = vmatprep.subr.bf16.mxu0 0
    %208 = vmatpush1.bf16.msra.mxu0 0
    %209 = vmatprep.mubr.bf16.mxu0 0
    %210 = vmatmul.mubr.bf16.gmra.mrb[0].mxu0 %v95
    %v211 = vpop.f32.mrb[0].mxu0
    %v212 = vadd.f32 0.0, %v211
    %v213 = vpop.f32.mrb[0].mxu0
    %v214 = vadd.f32 0.0, %v213
    %v215 = vpop.f32.mrb[0].mxu0
    %v216 = vadd.f32 0.0, %v215
    %v217 = vpop.f32.mrb[0].mxu0
    %v218 = vadd.f32 0.0, %v217
    %219 = vdwg.mxu0
    %v220 = vxor.u32 %v214, 2147483648
    %v221 = vxor.u32 %v218, 2147483648
    %v222 = vmul.f32 %v220, 1.442695
    %v223 = vpow.pop %v222
    %v224 = vmul.f32 %v221, 1.442695
    %v225 = vpow.pop %v224
    %v226 = vadd.f32 %v223, 1.0
    %v227 = vadd.f32 %v225, 1.0
    %v228 = vrcp.pop %v226
    %v229 = vmul.f32 1.0, %v228
    %v230 = vrcp.pop %v227
    %v231 = vmul.f32 1.0, %v230
    %v232 = vmul.f32 %v214, %v229
    %v233 = vmul.f32 %v218, %v231
    %v234 = vmul.f32 %v232, %v212
    %v235 = vmul.f32 %v233, %v216
    %v236 = vpack.c.bf16 %v235, %v234
    %v253 = vunpack.c.l.b16 %v75
    %v254 = vunpack.c.l.b16 %v76
    %v255 = vunpack.c.l.b16 %v77
    %v256 = vunpack.c.l.b16 %v78
    %v257 = vunpack.c.l.b16 %v79
    %v258 = vunpack.c.l.b16 %v80
    %v259 = vunpack.c.l.b16 %v81
    %v260 = vunpack.c.l.b16 %v82
    %v261 = vunpack.c.l.b16 %v83
    %v262 = vunpack.c.l.b16 %v84
    %v263 = vunpack.c.l.b16 %v85
    %v264 = vunpack.c.l.b16 %v86
    %v265 = vunpack.c.l.b16 %v87
    %v266 = vunpack.c.l.b16 %v88
    %v267 = vunpack.c.l.b16 %v89
    %v268 = vunpack.c.l.b16 %v90
    %v269 = vpack.c.b16 %v254, %v253
    %v270 = vpack.c.b16 %v256, %v255
    %v271 = vpack.c.b16 %v258, %v257
    %v272 = vpack.c.b16 %v260, %v259
    %v273 = vpack.c.b16 %v262, %v261
    %v274 = vpack.c.b16 %v264, %v263
    %v275 = vpack.c.b16 %v266, %v265
    %v276 = vpack.c.b16 %v268, %v267
    %285 = vmatprep.subr.bf16.mxu0 0
    %286 = vmatpush1.bf16.msra.mxu0 %v269
    %287 = vmatprep.subr.bf16.mxu0 0
    %288 = vmatpush1.bf16.msra.mxu0 %v270
    %289 = vmatprep.subr.bf16.mxu0 0
    %290 = vmatpush1.bf16.msra.mxu0 %v271
    %291 = vmatprep.subr.bf16.mxu0 0
    %292 = vmatpush1.bf16.msra.mxu0 %v272
    %293 = vmatprep.subr.bf16.mxu0 0
    %294 = vmatpush1.bf16.msra.mxu0 %v273
    %295 = vmatprep.subr.bf16.mxu0 0
    %296 = vmatpush1.bf16.msra.mxu0 %v274
    %297 = vmatprep.subr.bf16.mxu0 0
    %298 = vmatpush1.bf16.msra.mxu0 %v275
    %299 = vmatprep.subr.bf16.mxu0 0
    %300 = vmatpush1.bf16.msra.mxu0 %v276
    %301 = vmatprep.subr.bf16.mxu0 0
    %302 = vmatpush1.bf16.msra.mxu0 0
    %303 = vmatprep.subr.bf16.mxu0 0
    %304 = vmatpush1.bf16.msra.mxu0 0
    %305 = vmatprep.subr.bf16.mxu0 0
    %306 = vmatpush1.bf16.msra.mxu0 0
    %307 = vmatprep.subr.bf16.mxu0 0
    %308 = vmatpush1.bf16.msra.mxu0 0
    %309 = vmatprep.subr.bf16.mxu0 0
    %310 = vmatpush1.bf16.msra.mxu0 0
    %311 = vmatprep.subr.bf16.mxu0 0
    %312 = vmatpush1.bf16.msra.mxu0 0
    %313 = vmatprep.subr.bf16.mxu0 0
    %314 = vmatpush1.bf16.msra.mxu0 0
    %315 = vmatprep.subr.bf16.mxu0 0
    %316 = vmatpush1.bf16.msra.mxu0 0
    %317 = vmatprep.mubr.bf16.mxu0 0
    %318 = vmatmul.mubr.bf16.gmra.mrb[0].mxu0 %v236
    %v319 = vpop.f32.mrb[0].mxu0
    %v320 = vadd.f32 0.0, %v319
    %v321 = vpop.f32.mrb[0].mxu0
    %v322 = vpop.f32.mrb[0].mxu0
    %v323 = vadd.f32 0.0, %v322
    %v324 = vpop.f32.mrb[0].mxu0
    %325 = vdwg.mxu0
    %v326 = vpack.c.bf16 %v323, %v320
    %v328 = vunpack.c.l.b16 %v326
    %v329 = vunpack.c.h.b16 %v326
    %v330 = vpack.c.b16 %v328, %v328
    %v331 = vpack.c.b16 %v329, %v329
    %334 = vst [vmem:[#allocation8] sm:$0xf] %v330
    %335 = vst [vmem:[#allocation8 + $0x4] sm:$0xf] %v331
    // Predicated region
    $region26: #{tpu_custom_call.1} parent=1 // pred_check
      _
    $region27: #{tpu_custom_call.1} parent=1 // pred_check_branch
      %337 = sbr.rel (0) target = $region29
    $region28: #{tpu_custom_call.1} parent=1 // pred_region
      %s339 = ssub.s32 128, 128
      %340 = vsyncadd [#allocation4], %s339
      %s341 = sshll.u32 [#allocation8], 4
      %s342 = int_to_ptr.vmem [resolvable:$true] %s341
      %347 = dma.vmem_to_hbm [thread:$0]  %s342, 128, %s3, [#allocation4], 64, 64, 4
    $region29: #{tpu_custom_call.1} parent=1 // pred_fallthru
      _
    // Predicated region
    $region30: #{tpu_custom_call.1} parent=1 // pred_check
      _
    $region31: #{tpu_custom_call.1} parent=1 // pred_check_branch
      %349 = sbr.rel (0) target = $region33
    $region32: #{tpu_custom_call.1} parent=1 // pred_region
      %350 = dma.done [#allocation4], 128
    $region33: #{tpu_custom_call.1} parent=1 // pred_fallthru
      _
    %351 = vsyncpa [#allocation3], 1
    %352 = vsyncpa [#allocation6], 1
    %353 = vsyncpa [#allocation4], 1

</llo_original>
